<compile_context>
chip_gen: v6e
topology: v6e:2x2x1
jax: 0.10.0
libtpu: 0.0.40
codegen_flags: <defaults>
</compile_context>

<pallas_src>
import functools

import jax
import jax.numpy as jnp
from jax.experimental import pallas as pl
from jax.experimental.pallas import tpu as pltpu

LANE = 128   # lane-dense output width
TM = 256     # Â row-tile (output rows)
TK = 512     # Â contraction tile (multiple of 256 and 128)


def _round_up(x, m):
    return (x + m - 1) // m * m


# --------------------------- transform:  XW = X @ W --------------------------
def _transform_kernel(x_ref, w_ref, o_ref):
    o_ref[...] = jnp.dot(
        x_ref[...], w_ref[...], preferred_element_type=jnp.float32
    ).astype(o_ref.dtype)


def linear_transform(x_pad, w_pad):
    """Row-tiled X @ W with lane-padded W; output bf16 (feeds the MXU next)."""
    n_pad, f_in = x_pad.shape
    f_pad = w_pad.shape[1]
    return pl.pallas_call(
        _transform_kernel,
        out_shape=jax.ShapeDtypeStruct((n_pad, f_pad), jnp.bfloat16),
        grid=(n_pad // TM,),
        in_specs=[
            pl.BlockSpec((TM, f_in), lambda i: (i, 0)),
            pl.BlockSpec((f_in, f_pad), lambda i: (0, 0)),
        ],
        out_specs=pl.BlockSpec((TM, f_pad), lambda i: (i, 0)),
        compiler_params=pltpu.CompilerParams(
            dimension_semantics=("parallel",),
            vmem_limit_bytes=48 * 1024 * 1024,
        ),
    )(x_pad, w_pad)


# ---------------------- aggregation:  out = Â @ XW + b -----------------------
def _aggregate_kernel(adj_ref, xw_ref, b_ref, o_ref, acc_ref, *, apply_relu):
    k = pl.program_id(1)

    @pl.when(k == 0)
    def _():
        acc_ref[...] = jnp.zeros_like(acc_ref)

    acc_ref[...] += jnp.dot(
        adj_ref[...], xw_ref[...], preferred_element_type=jnp.float32
    )

    @pl.when(k == pl.num_programs(1) - 1)
    def _():
        out = acc_ref[...] + b_ref[...]
        if apply_relu:
            out = jnp.maximum(out, 0.0)
        o_ref[...] = out.astype(o_ref.dtype)


def aggregate(adj_pad, xw_pad, b_pad, *, apply_relu, out_dtype):
    n_pad = adj_pad.shape[0]
    kernel = functools.partial(_aggregate_kernel, apply_relu=apply_relu)
    return pl.pallas_call(
        kernel,
        out_shape=jax.ShapeDtypeStruct((n_pad, LANE), out_dtype),
        grid=(n_pad // TM, n_pad // TK),
        in_specs=[
            pl.BlockSpec((TM, TK), lambda i, k: (i, k)),      # Â tile   (bf16)
            pl.BlockSpec((TK, LANE), lambda i, k: (k, 0)),    # XW tile  (bf16)
            pl.BlockSpec((1, LANE), lambda i, k: (0, 0)),     # bias     (f32)
        ],
        out_specs=pl.BlockSpec((TM, LANE), lambda i, k: (i, 0)),
        scratch_shapes=[pltpu.VMEM((TM, LANE), jnp.float32)],
        compiler_params=pltpu.CompilerParams(
            dimension_semantics=("parallel", "arbitrary"),
            vmem_limit_bytes=48 * 1024 * 1024,
        ),
    )(adj_pad, xw_pad, b_pad)


# ------------------------------ one GCNConv layer ----------------------------
def gcn_layer(adj_pad, x_pad, w, b, *, apply_relu, out_dtype):
    n_pad, f_in_pad = x_pad.shape
    f_in, f_out = w.shape
    # Zero-pad W to (f_in_pad, 128) and bias to (1, 128) -> lane-dense output.
    w_pad = (
        jnp.zeros((f_in_pad, LANE), jnp.bfloat16)
        .at[:f_in, :f_out]
        .set(w.astype(jnp.bfloat16))
    )
    b_pad = jnp.zeros((1, LANE), jnp.float32).at[:, :f_out].set(b.reshape(1, f_out))
    xw = linear_transform(x_pad, w_pad)
    return aggregate(adj_pad, xw, b_pad, apply_relu=apply_relu, out_dtype=out_dtype)


# ----------------------- normalized adjacency (JAX glue) ---------------------
def normalized_adjacency(edge_index, num_nodes, n_pad):
    """Dense, zero-padded, bf16 Â matching PyG gcn_norm semantics."""
    # TODO(synk): for real Cora-scale graphs replace this dense O(N^2) Â with a
    # CSR/ELL sparse aggregation driven by PrefetchScalarGridSpec row pointers.
    src, dst = edge_index[0], edge_index[1]
    a = jnp.zeros((num_nodes, num_nodes), jnp.float32)
    a = a.at[dst, src].add(1.0)                      # per-edge scatter-add (PyG parity)
    # add_remaining_self_loops: only nodes without an existing self loop get one.
    diag = jnp.diagonal(a)
    a = a + jnp.diag(jnp.where(diag > 0.0, 0.0, 1.0))
    deg = a.sum(axis=1)
    dinv = jnp.where(deg > 0.0, jax.lax.rsqrt(deg), 0.0)
    a_norm = dinv[:, None] * a * dinv[None, :]
    out = jnp.zeros((n_pad, n_pad), jnp.bfloat16)
    return out.at[:num_nodes, :num_nodes].set(a_norm.astype(jnp.bfloat16))


# --------------------------------- full model --------------------------------
def gcn_forward(x, edge_index, params, num_classes):
    w1, b1, w2, b2 = params
    n, f_in = x.shape
    n_pad = _round_up(n, TK)
    adj = normalized_adjacency(edge_index, n, n_pad)
    x_pad = jnp.zeros((n_pad, f_in), jnp.bfloat16).at[:n].set(x.astype(jnp.bfloat16))

    h = gcn_layer(adj, x_pad, w1, b1, apply_relu=True, out_dtype=jnp.bfloat16)
    # TODO(synk): F.dropout(x, training=self.training) — eval mode ⇒ identity.
    out = gcn_layer(adj, h, w2, b2, apply_relu=False, out_dtype=jnp.float32)
    return out[:n, :num_classes]


if __name__ == "__main__":
    # Small synthetic "Cora-like" graph.
    N, F_IN, HIDDEN, N_CLASSES, E = 32, 8, 16, 7, 64

    key = jax.random.PRNGKey(0)
    k_edge, k_x, k_w1, k_w2 = jax.random.split(key, 4)

    # Deterministic random edge set, symmetrized.
    edges = jax.random.randint(k_edge, (2, E), 0, N)
    edge_index = jnp.concatenate([edges, edges[::-1]], axis=1)

    x = jax.random.normal(k_x, (N, F_IN), dtype=jnp.float32)

    def glorot(k, shape):
        bound = (6.0 / (shape[0] + shape[1])) ** 0.5
        return jax.random.uniform(k, shape, jnp.float32, -bound, bound)

    # GCNConv params: glorot weight, zero bias (PyG defaults).
    w1 = glorot(k_w1, (F_IN, HIDDEN))
    b1 = jnp.zeros((HIDDEN,), jnp.float32)
    w2 = glorot(k_w2, (HIDDEN, N_CLASSES))
    b2 = jnp.zeros((N_CLASSES,), jnp.float32)

    out = gcn_forward(x, edge_index, (w1, b1, w2, b2), N_CLASSES)
    jax.block_until_ready(out)
    assert out.shape == (N, N_CLASSES) and out.dtype == jnp.float32
    assert bool(jnp.all(jnp.isfinite(out)))
    print("KERNEL_OK")
</pallas_src>

<mosaic_0001>
module attributes {stable_mosaic.version = 11 : i64} {
  func.func @_transform_kernel(%arg0: i32, %arg1: memref<256x8xbf16, #tpu.memory_space<vmem>>, %arg2: memref<8x128xbf16, #tpu.memory_space<vmem>>, %arg3: memref<256x128xbf16, #tpu.memory_space<vmem>>) attributes {dimension_semantics = [#tpu.dimension_semantics<parallel>], iteration_bounds = array<i64: 2>, scalar_prefetch = 0 : i64, scratch_operands = 0 : i64, tpu.core_type = #tpu.core_type<tc>, window_params = [{transform_indices = @transform_0, window_bounds = array<i64: 256, 8>}, {pipeline_mode = #tpu.pipeline_mode<synchronous>, transform_indices = @transform_1, window_bounds = array<i64: 8, 128>}, {transform_indices = @transform_2, window_bounds = array<i64: 256, 128>}]} {
    %c0 = arith.constant 0 : index
    %c0_0 = arith.constant 0 : index
    %0 = vector.load %arg1[%c0, %c0_0] : memref<256x8xbf16, #tpu.memory_space<vmem>>, vector<256x8xbf16>
    %c0_1 = arith.constant 0 : index
    %c0_2 = arith.constant 0 : index
    %1 = vector.load %arg2[%c0_1, %c0_2] : memref<8x128xbf16, #tpu.memory_space<vmem>>, vector<8x128xbf16>
    %cst = arith.constant dense<0.000000e+00> : vector<256x128xf32>
    %2 = tpu.matmul %0, %1, %cst {dimension_numbers = #tpu.dot_dimension_numbers<[1], [0], [0], [1], [0, 0, 1, 1], [], []>} : vector<256x8xbf16>, vector<8x128xbf16>, vector<256x128xf32> -> vector<256x128xf32>
    %3 = arith.truncf %2 : vector<256x128xf32> to vector<256x128xbf16>
    %c0_3 = arith.constant 0 : index
    %c0_4 = arith.constant 0 : index
    %4 = vector.load %arg3[%c0_3, %c0_4] : memref<256x128xbf16, #tpu.memory_space<vmem>>, vector<256x128xbf16>
    tpu.vector_store %arg3[%c0_3, %c0_4], %3 {strides = array<i32>} : memref<256x128xbf16, #tpu.memory_space<vmem>>, vector<256x128xbf16>,
    return
  }
  func.func @transform_0(%arg0: i32) -> (i32, i32) {
    %c0_i32 = arith.constant 0 : i32
    %c0_i32_0 = arith.constant 0 : i32
    return %arg0, %c0_i32 : i32, i32
  }
  func.func @transform_1(%arg0: i32) -> (i32, i32) {
    %c0_i32 = arith.constant 0 : i32
    %c0_i32_0 = arith.constant 0 : i32
    %c0_i32_1 = arith.constant 0 : i32
    return %c0_i32, %c0_i32_0 : i32, i32
  }
  func.func @transform_2(%arg0: i32) -> (i32, i32) {
    %c0_i32 = arith.constant 0 : i32
    %c0_i32_0 = arith.constant 0 : i32
    return %arg0, %c0_i32 : i32, i32
  }
}

</mosaic_0001>

<llo_original>
// kernel: tpu_custom_call.1
$region0: #{tpu_custom_call.1}
  #allocation0 [shape = 'u32[]', space=smem, size = 0x4, offset = 0x4, fixed_abs, tag = 'smem constant byte address 0x4 - core index']
  #allocation1 [shape = 'u32[144,128]{1,0:T(1,128)}', space=vmem, size = 0x12000, scoped, tag = 'internal scratch']
  %s0 = inlined_call_operand.vmem [shape: bf16[512,8], index: 0, kind: input, shape index: {}]
  %s1 = inlined_call_operand.vmem [shape: bf16[8,128], index: 1, kind: input, shape index: {}]
  %s2 = inlined_call_operand.hbm [shape: bf16[512,128], index: 2, kind: output, shape index: {}]
  %s3 = sld [smem:[#allocation0]]
  $region41: #{tpu_custom_call.1} parent=0
    _
  %s5 = ssub.s32 1, %s3
  %s6 = scalar_select 0, %s5, %s3
  $region1: #{tpu_custom_call.1} parent=0
    #allocation2 [shape = 'u8[131072]{0}', space=vmem, size = 0x20000, scoped, tag = 'output window, operand 0']
    #allocation3 [shape = 's32[2]{0}', space=sflag, size = 0x8, scoped, tag = 'scoped memory for tpu_custom_call.1']
    %7 = vsyncpa [#allocation3], 0
    %s8 = scalar_lea.sflag [#allocation3], 1
    %9 = vsyncpa %s8, 0
    loop: start=0, step=1, limit=4
    $region2: #{tpu_custom_call.1} parent=1 // loop_pre_header
      _
    $region3: #{tpu_custom_call.1} parent=1 // loop_header
      %s11 = sphi 0, %s15
      %p12 = scmp.ge.s32.totalorder %s11, 4
      %s21 = sphi 0, %s23
      %s24 = sphi 0, %s21
      %s25 = sphi 0, %s24
      %s41 = sphi 0, %s25
      %s45 = sphi 0, %s45
      %s47 = sphi 0, %s45
      %s48 = sphi 0, %s47
      %s62 = sphi 0, %s48
      %s68 = sphi 0, %s70
      %s71 = sphi 0, %s68
      %s72 = sphi 0, %s71
      %s88 = sphi 0, %s72
    $region4: #{tpu_custom_call.1} parent=1 // loop_header_branch
      %14 = sbr.rel (%p12) target = $region8
    $region5: #{tpu_custom_call.1} parent=1 // loop_body
      %s16 = ssub.s32 %s11, 1
      %s17 = ssub.s32 %s11, 2
      %s18 = sadd.s32 %s11, 1
      %s19 = ssub.s32 %s11, %s18
      %p20 = scmp.eq.s32.totalorder %s19, 0
      %s22 = sadd.s32 %s21, 1
      %s23 = scalar_select %p20, %s21, %s22
      %p26 = pneg %p20
      %p27 = scmp.eq.s32.totalorder %s11, 1
      %p28 = por %p26, %p27
      %p29 = scmp.ne.s32.totalorder %s21, %s24
      %p30 = scmp.eq.s32.totalorder %s11, 0
      %p31 = por %p29, %p30
      %p32 = scmp.ne.s32.totalorder %s21, %s24
      %p33 = scmp.eq.s32.totalorder %s16, 1
      %p34 = por %p32, %p33
      %p35 = scmp.ne.s32.totalorder %s24, %s25
      %p36 = scmp.eq.s32.totalorder %s16, 0
      %p37 = por %p35, %p36
      %p38 = scmp.ne.s32.totalorder %s24, %s25
      %p39 = scmp.eq.s32.totalorder %s17, 1
      %p40 = por %p38, %p39
      %p42 = scmp.ne.s32.totalorder %s25, %s41
      %p43 = scmp.eq.s32.totalorder %s17, 0
      %p44 = por %p42, %p43
      %s46 = sadd.s32 %s45, 1
      %p49 = scmp.eq.s32.totalorder %s11, 1
      %p50 = scmp.ne.s32.totalorder %s45, %s47
      %p51 = scmp.eq.s32.totalorder %s11, 0
      %p52 = por %p50, %p51
      %p53 = scmp.ne.s32.totalorder %s45, %s47
      %p54 = scmp.eq.s32.totalorder %s16, 1
      %p55 = por %p53, %p54
      %p56 = scmp.ne.s32.totalorder %s47, %s48
      %p57 = scmp.eq.s32.totalorder %s16, 0
      %p58 = por %p56, %p57
      %p59 = scmp.ne.s32.totalorder %s47, %s48
      %p60 = scmp.eq.s32.totalorder %s17, 1
      %p61 = por %p59, %p60
      %p63 = scmp.ne.s32.totalorder %s48, %s62
      %p64 = scmp.eq.s32.totalorder %s17, 0
      %p65 = por %p63, %p64
      %s66 = ssub.s32 %s11, %s18
      %p67 = scmp.eq.s32.totalorder %s66, 0
      %s69 = sadd.s32 %s68, 1
      %s70 = scalar_select %p67, %s68, %s69
      %p73 = pneg %p67
      %p74 = scmp.eq.s32.totalorder %s11, 1
      %p75 = por %p73, %p74
      %p76 = scmp.ne.s32.totalorder %s68, %s71
      %p77 = scmp.eq.s32.totalorder %s11, 0
      %p78 = por %p76, %p77
      %p79 = scmp.ne.s32.totalorder %s68, %s71
      %p80 = scmp.eq.s32.totalorder %s16, 1
      %p81 = por %p79, %p80
      %p82 = scmp.ne.s32.totalorder %s71, %s72
      %p83 = scmp.eq.s32.totalorder %s16, 0
      %p84 = por %p82, %p83
      %p85 = scmp.ne.s32.totalorder %s71, %s72
      %p86 = scmp.eq.s32.totalorder %s17, 1
      %p87 = por %p85, %p86
      %p89 = scmp.ne.s32.totalorder %s72, %s88
      %p90 = scmp.eq.s32.totalorder %s17, 0
      %p91 = por %p89, %p90
      %p92 = scmp.le.s32.totalorder 1, %s11
      %p93 = scmp.lt.s32.totalorder %s11, 3
      %p94 = pnand %p92, %p93
      %p95 = pneg %p94
      // Predicated region
      $region9: #{tpu_custom_call.1} parent=5 // pred_check
        _
      $region10: #{tpu_custom_call.1} parent=5 // pred_check_branch
        %97 = sbr.rel (%p94) target = $region12
      $region11: #{tpu_custom_call.1} parent=5 // pred_region
        %s98 = ssub.s32 %s11, 1
        // Predicated region
        $region13: #{tpu_custom_call.1} parent=11 // pred_check
          %p99 = pneg %p58
        $region14: #{tpu_custom_call.1} parent=11 // pred_check_branch
          %101 = sbr.rel (%p99) target = $region16
        $region15: #{tpu_custom_call.1} parent=11 // pred_region
          _
        $region16: #{tpu_custom_call.1} parent=11 // pred_fallthru
          _
      $region12: #{tpu_custom_call.1} parent=5 // pred_fallthru
        _
      %p102 = scmp.lt.s32.totalorder %s11, 2
      // Predicated region
      $region17: #{tpu_custom_call.1} parent=5 // pred_check
        %p103 = pneg %p102
      $region18: #{tpu_custom_call.1} parent=5 // pred_check_branch
        %105 = sbr.rel (%p103) target = $region20
      $region19: #{tpu_custom_call.1} parent=5 // pred_region
        // Predicated region
        $region21: #{tpu_custom_call.1} parent=19 // pred_check
          %p106 = pneg %p31
        $region22: #{tpu_custom_call.1} parent=19 // pred_check_branch
          %108 = sbr.rel (%p106) target = $region24
        $region23: #{tpu_custom_call.1} parent=19 // pred_region
          %s109 = smul.u32 32, %s11
          %p110 = scmp.lt.s32.totalorder %s109, 63
          %s111 = scalar_select %p110, %s109, 63
          %s112 = smul.addr %s111, 4
          %s113 = scalar_lea.vmem %s0, %s112
          %s114 = smul.u32 32, %s11
        $region24: #{tpu_custom_call.1} parent=19 // pred_fallthru
          _
      $region20: #{tpu_custom_call.1} parent=5 // pred_fallthru
        _
      %p115 = scmp.le.s32.totalorder 1, %s11
      %p116 = scmp.lt.s32.totalorder %s11, 3
      %p117 = pnand %p115, %p116
      %p118 = pneg %p117
      // Predicated region
      $region25: #{tpu_custom_call.1} parent=5 // pred_check
        _
      $region26: #{tpu_custom_call.1} parent=5 // pred_check_branch
        %120 = sbr.rel (%p117) target = $region28
      $region27: #{tpu_custom_call.1} parent=5 // pred_region
        %s121 = ssub.s32 %s11, 1
        %s122 = smul.u32 32, %s16
        %p123 = scmp.lt.s32.totalorder %s122, 63
        %s124 = scalar_select %p123, %s122, 63
        %s125 = smul.addr %s124, 4
        %s126 = scalar_lea.vmem %s0, %s125
        %p127 = pneg %p37
        %p128 = pneg %p34
        %p129 = pneg %p58
        %p130 = pneg %p55
        %p131 = pneg %p84
        %p132 = pneg %p81
        %s133 = sand.u32 %s71, 1
        %s134 = scalar_lea.sflag [#allocation3], %s133
        %s135 = sand.u32 %s71, 1
        %s136 = smul.addr %s135, 128
        %s137 = scalar_lea.vmem [#allocation2], %s136
        %s138 = smul.u32 32, %s16
        %p139 = scmp.lt.s32.totalorder %s138, 63
        %s140 = scalar_select %p139, %s138, 63
        %s141 = smul.addr %s140, 4
        %s142 = scalar_lea.vmem %s0, %s141
        %s143 = smul.u32 32, %s16
        %s144 = smul.u32 32, %s16
        %v146 = vld [vmem:[%s142] sm:$0xf]
        %v147 = vld [vmem:[%s142 + $0x4] sm:$0xf]
        %v148 = vld [vmem:[%s142 + $0x8] sm:$0xf]
        %v149 = vld [vmem:[%s142 + $0xc] sm:$0xf]
        %v150 = vld [vmem:[%s142 + $0x10] sm:$0xf]
        %v151 = vld [vmem:[%s142 + $0x14] sm:$0xf]
        %v152 = vld [vmem:[%s142 + $0x18] sm:$0xf]
        %v153 = vld [vmem:[%s142 + $0x1c] sm:$0xf]
        %v154 = vld [vmem:[%s142 + $0x20] sm:$0xf]
        %v155 = vld [vmem:[%s142 + $0x24] sm:$0xf]
        %v156 = vld [vmem:[%s142 + $0x28] sm:$0xf]
        %v157 = vld [vmem:[%s142 + $0x2c] sm:$0xf]
        %v158 = vld [vmem:[%s142 + $0x30] sm:$0xf]
        %v159 = vld [vmem:[%s142 + $0x34] sm:$0xf]
        %v160 = vld [vmem:[%s142 + $0x38] sm:$0xf]
        %v161 = vld [vmem:[%s142 + $0x3c] sm:$0xf]
        %v162 = vld [vmem:[%s142 + $0x40] sm:$0xf]
        %v163 = vld [vmem:[%s142 + $0x44] sm:$0xf]
        %v164 = vld [vmem:[%s142 + $0x48] sm:$0xf]
        %v165 = vld [vmem:[%s142 + $0x4c] sm:$0xf]
        %v166 = vld [vmem:[%s142 + $0x50] sm:$0xf]
        %v167 = vld [vmem:[%s142 + $0x54] sm:$0xf]
        %v168 = vld [vmem:[%s142 + $0x58] sm:$0xf]
        %v169 = vld [vmem:[%s142 + $0x5c] sm:$0xf]
        %v170 = vld [vmem:[%s142 + $0x60] sm:$0xf]
        %v171 = vld [vmem:[%s142 + $0x64] sm:$0xf]
        %v172 = vld [vmem:[%s142 + $0x68] sm:$0xf]
        %v173 = vld [vmem:[%s142 + $0x6c] sm:$0xf]
        %v174 = vld [vmem:[%s142 + $0x70] sm:$0xf]
        %v175 = vld [vmem:[%s142 + $0x74] sm:$0xf]
        %v176 = vld [vmem:[%s142 + $0x78] sm:$0xf]
        %v177 = vld [vmem:[%s142 + $0x7c] sm:$0xf]
        %v178 = vld [vmem:[%s1] sm:$0xf]
        %v211 = vunpack.c.l.b16 %v146
        %v212 = vunpack.c.l.b16 %v147
        %v213 = vunpack.c.l.b16 %v148
        %v214 = vunpack.c.l.b16 %v149
        %v215 = vunpack.c.l.b16 %v150
        %v216 = vunpack.c.l.b16 %v151
        %v217 = vunpack.c.l.b16 %v152
        %v218 = vunpack.c.l.b16 %v153
        %v219 = vunpack.c.l.b16 %v154
        %v220 = vunpack.c.l.b16 %v155
        %v221 = vunpack.c.l.b16 %v156
        %v222 = vunpack.c.l.b16 %v157
        %v223 = vunpack.c.l.b16 %v158
        %v224 = vunpack.c.l.b16 %v159
        %v225 = vunpack.c.l.b16 %v160
        %v226 = vunpack.c.l.b16 %v161
        %v227 = vunpack.c.l.b16 %v162
        %v228 = vunpack.c.l.b16 %v163
        %v229 = vunpack.c.l.b16 %v164
        %v230 = vunpack.c.l.b16 %v165
        %v231 = vunpack.c.l.b16 %v166
        %v232 = vunpack.c.l.b16 %v167
        %v233 = vunpack.c.l.b16 %v168
        %v234 = vunpack.c.l.b16 %v169
        %v235 = vunpack.c.l.b16 %v170
        %v236 = vunpack.c.l.b16 %v171
        %v237 = vunpack.c.l.b16 %v172
        %v238 = vunpack.c.l.b16 %v173
        %v239 = vunpack.c.l.b16 %v174
        %v240 = vunpack.c.l.b16 %v175
        %v241 = vunpack.c.l.b16 %v176
        %v242 = vunpack.c.l.b16 %v177
        %v243 = vpack.c.b16 %v212, %v211
        %v244 = vpack.c.b16 %v214, %v213
        %v245 = vpack.c.b16 %v216, %v215
        %v246 = vpack.c.b16 %v218, %v217
        %v247 = vpack.c.b16 %v220, %v219
        %v248 = vpack.c.b16 %v222, %v221
        %v249 = vpack.c.b16 %v224, %v223
        %v250 = vpack.c.b16 %v226, %v225
        %v251 = vpack.c.b16 %v228, %v227
        %v252 = vpack.c.b16 %v230, %v229
        %v253 = vpack.c.b16 %v232, %v231
        %v254 = vpack.c.b16 %v234, %v233
        %v255 = vpack.c.b16 %v236, %v235
        %v256 = vpack.c.b16 %v238, %v237
        %v257 = vpack.c.b16 %v240, %v239
        %v258 = vpack.c.b16 %v242, %v241
        %vm259 = vcmask 64512
        %v261 = vsel %vm259, %v243, 0
        %v264 = vsel %vm259, %v244, 0
        %v267 = vsel %vm259, %v245, 0
        %v270 = vsel %vm259, %v246, 0
        %v273 = vsel %vm259, %v247, 0
        %v276 = vsel %vm259, %v248, 0
        %v279 = vsel %vm259, %v249, 0
        %v282 = vsel %vm259, %v250, 0
        %v285 = vsel %vm259, %v251, 0
        %v288 = vsel %vm259, %v252, 0
        %v291 = vsel %vm259, %v253, 0
        %v294 = vsel %vm259, %v254, 0
        %v297 = vsel %vm259, %v255, 0
        %v300 = vsel %vm259, %v256, 0
        %v303 = vsel %vm259, %v257, 0
        %v306 = vsel %vm259, %v258, 0
        %vm308 = vcmask 1043456
        %v310 = vsel %vm308, %v178, 0
        %312 = vmatprep.subr.bf16.mxu0 0
        %313 = vmatpush1.bf16.msra.mxu0 0
        %314 = vmatprep.subr.bf16.mxu0 0
        %315 = vmatpush1.bf16.msra.mxu0 0
        %316 = vmatprep.subr.bf16.mxu0 0
        %317 = vmatpush1.bf16.msra.mxu0 0
        %318 = vmatprep.subr.bf16.mxu0 0
        %319 = vmatpush1.bf16.msra.mxu0 0
        %320 = vmatprep.subr.bf16.mxu0 0
        %321 = vmatpush1.bf16.msra.mxu0 0
        %322 = vmatprep.subr.bf16.mxu0 0
        %323 = vmatpush1.bf16.msra.mxu0 0
        %324 = vmatprep.subr.bf16.mxu0 0
        %325 = vmatpush1.bf16.msra.mxu0 0
        %326 = vmatprep.subr.bf16.mxu0 0
        %327 = vmatpush1.bf16.msra.mxu0 %v310
        %328 = vmatprep.subr.bf16.mxu0 0
        %329 = vmatpush2.bf16.msra.mxu0 0
        %330 = vmatprep.subr.bf16.mxu0 0
        %331 = vmatpush2.bf16.msra.mxu0 0
        %332 = vmatprep.subr.bf16.mxu0 0
        %333 = vmatpush2.bf16.msra.mxu0 0
        %334 = vmatprep.subr.bf16.mxu0 0
        %335 = vmatpush2.bf16.msra.mxu0 0
        %336 = vmatprep.subr.bf16.mxu0 0
        %337 = vmatpush2.bf16.msra.mxu0 0
        %338 = vmatprep.subr.bf16.mxu0 0
        %339 = vmatpush2.bf16.msra.mxu0 0
        %340 = vmatprep.subr.bf16.mxu0 0
        %341 = vmatpush2.bf16.msra.mxu0 0
        %342 = vmatprep.subr.bf16.mxu0 0
        %343 = vmatpush2.bf16.msra.mxu0 0
        %344 = vmatprep.mubr.bf16.mxu0 0
        %345 = vmatmul.mubr.bf16.gmra.mxu0 %v261
        %v346 = vpop.f32.mrf.mxu0
        %v347 = vadd.f32 0.0, %v346
        %v348 = vpop.f32.mrf.mxu0
        %v349 = vpop.f32.mrf.mxu0
        %v350 = vadd.f32 0.0, %v349
        %v351 = vpop.f32.mrf.mxu0
        %352 = vmatprep.mubr.bf16.mxu0 0
        %353 = vmatmul.mubr.bf16.gmra.mxu0 %v264
        %v354 = vpop.f32.mrf.mxu0
        %v355 = vadd.f32 0.0, %v354
        %v356 = vpop.f32.mrf.mxu0
        %v357 = vpop.f32.mrf.mxu0
        %v358 = vadd.f32 0.0, %v357
        %v359 = vpop.f32.mrf.mxu0
        %360 = vmatprep.mubr.bf16.mxu0 0
        %361 = vmatmul.mubr.bf16.gmra.mxu0 %v267
        %v362 = vpop.f32.mrf.mxu0
        %v363 = vadd.f32 0.0, %v362
        %v364 = vpop.f32.mrf.mxu0
        %v365 = vpop.f32.mrf.mxu0
        %v366 = vadd.f32 0.0, %v365
        %v367 = vpop.f32.mrf.mxu0
        %368 = vmatprep.mubr.bf16.mxu0 0
        %369 = vmatmul.mubr.bf16.gmra.mxu0 %v270
        %v370 = vpop.f32.mrf.mxu0
        %v371 = vadd.f32 0.0, %v370
        %v372 = vpop.f32.mrf.mxu0
        %v373 = vpop.f32.mrf.mxu0
        %v374 = vadd.f32 0.0, %v373
        %v375 = vpop.f32.mrf.mxu0
        %376 = vmatprep.mubr.bf16.mxu0 0
        %377 = vmatmul.mubr.bf16.gmra.mxu0 %v273
        %v378 = vpop.f32.mrf.mxu0
        %v379 = vadd.f32 0.0, %v378
        %v380 = vpop.f32.mrf.mxu0
        %v381 = vpop.f32.mrf.mxu0
        %v382 = vadd.f32 0.0, %v381
        %v383 = vpop.f32.mrf.mxu0
        %384 = vmatprep.mubr.bf16.mxu0 0
        %385 = vmatmul.mubr.bf16.gmra.mxu0 %v276
        %v386 = vpop.f32.mrf.mxu0
        %v387 = vadd.f32 0.0, %v386
        %v388 = vpop.f32.mrf.mxu0
        %v389 = vpop.f32.mrf.mxu0
        %v390 = vadd.f32 0.0, %v389
        %v391 = vpop.f32.mrf.mxu0
        %392 = vmatprep.mubr.bf16.mxu0 0
        %393 = vmatmul.mubr.bf16.gmra.mxu0 %v279
        %v394 = vpop.f32.mrf.mxu0
        %v395 = vadd.f32 0.0, %v394
        %v396 = vpop.f32.mrf.mxu0
        %v397 = vpop.f32.mrf.mxu0
        %v398 = vadd.f32 0.0, %v397
        %v399 = vpop.f32.mrf.mxu0
        %400 = vmatprep.mubr.bf16.mxu0 0
        %401 = vmatmul.mubr.bf16.gmra.mxu0 %v282
        %v402 = vpop.f32.mrf.mxu0
        %v403 = vadd.f32 0.0, %v402
        %v404 = vpop.f32.mrf.mxu0
        %v405 = vpop.f32.mrf.mxu0
        %v406 = vadd.f32 0.0, %v405
        %v407 = vpop.f32.mrf.mxu0
        %408 = vmatprep.mubr.bf16.mxu0 0
        %409 = vmatmul.mubr.bf16.gmra.mxu0 %v285
        %v410 = vpop.f32.mrf.mxu0
        %v411 = vadd.f32 0.0, %v410
        %v412 = vpop.f32.mrf.mxu0
        %v413 = vpop.f32.mrf.mxu0
        %v414 = vadd.f32 0.0, %v413
        %v415 = vpop.f32.mrf.mxu0
        %416 = vmatprep.mubr.bf16.mxu0 0
        %417 = vmatmul.mubr.bf16.gmra.mxu0 %v288
        %v418 = vpop.f32.mrf.mxu0
        %v419 = vadd.f32 0.0, %v418
        %v420 = vpop.f32.mrf.mxu0
        %v421 = vpop.f32.mrf.mxu0
        %v422 = vadd.f32 0.0, %v421
        %v423 = vpop.f32.mrf.mxu0
        %424 = vmatprep.mubr.bf16.mxu0 0
        %425 = vmatmul.mubr.bf16.gmra.mxu0 %v291
        %v426 = vpop.f32.mrf.mxu0
        %v427 = vadd.f32 0.0, %v426
        %v428 = vpop.f32.mrf.mxu0
        %v429 = vpop.f32.mrf.mxu0
        %v430 = vadd.f32 0.0, %v429
        %v431 = vpop.f32.mrf.mxu0
        %432 = vmatprep.mubr.bf16.mxu0 0
        %433 = vmatmul.mubr.bf16.gmra.mxu0 %v294
        %v434 = vpop.f32.mrf.mxu0
        %v435 = vadd.f32 0.0, %v434
        %v436 = vpop.f32.mrf.mxu0
        %v437 = vpop.f32.mrf.mxu0
        %v438 = vadd.f32 0.0, %v437
        %v439 = vpop.f32.mrf.mxu0
        %440 = vmatprep.mubr.bf16.mxu0 0
        %441 = vmatmul.mubr.bf16.gmra.mxu0 %v297
        %v442 = vpop.f32.mrf.mxu0
        %v443 = vadd.f32 0.0, %v442
        %v444 = vpop.f32.mrf.mxu0
        %v445 = vpop.f32.mrf.mxu0
        %v446 = vadd.f32 0.0, %v445
        %v447 = vpop.f32.mrf.mxu0
        %448 = vmatprep.mubr.bf16.mxu0 0
        %449 = vmatmul.mubr.bf16.gmra.mxu0 %v300
        %v450 = vpop.f32.mrf.mxu0
        %v451 = vadd.f32 0.0, %v450
        %v452 = vpop.f32.mrf.mxu0
        %v453 = vpop.f32.mrf.mxu0
        %v454 = vadd.f32 0.0, %v453
        %v455 = vpop.f32.mrf.mxu0
        %456 = vmatprep.mubr.bf16.mxu0 0
        %457 = vmatmul.mubr.bf16.gmra.mxu0 %v303
        %v458 = vpop.f32.mrf.mxu0
        %v459 = vadd.f32 0.0, %v458
        %v460 = vpop.f32.mrf.mxu0
        %v461 = vpop.f32.mrf.mxu0
        %v462 = vadd.f32 0.0, %v461
        %v463 = vpop.f32.mrf.mxu0
        %464 = vmatprep.mubr.bf16.mxu0 0
        %465 = vmatmul.mubr.bf16.gmra.mxu0 %v306
        %v466 = vpop.f32.mrf.mxu0
        %v467 = vadd.f32 0.0, %v466
        %v468 = vpop.f32.mrf.mxu0
        %v469 = vpop.f32.mrf.mxu0
        %v470 = vadd.f32 0.0, %v469
        %v471 = vpop.f32.mrf.mxu0
        %472 = vdwg.mxu0
        %v473 = vpack.c.bf16 %v350, %v347
        %v474 = vpack.c.bf16 %v358, %v355
        %v475 = vpack.c.bf16 %v366, %v363
        %v476 = vpack.c.bf16 %v374, %v371
        %v477 = vpack.c.bf16 %v382, %v379
        %v478 = vpack.c.bf16 %v390, %v387
        %v479 = vpack.c.bf16 %v398, %v395
        %v480 = vpack.c.bf16 %v406, %v403
        %v481 = vpack.c.bf16 %v414, %v411
        %v482 = vpack.c.bf16 %v422, %v419
        %v483 = vpack.c.bf16 %v430, %v427
        %v484 = vpack.c.bf16 %v438, %v435
        %v485 = vpack.c.bf16 %v446, %v443
        %v486 = vpack.c.bf16 %v454, %v451
        %v487 = vpack.c.bf16 %v462, %v459
        %v488 = vpack.c.bf16 %v470, %v467
        %v505 = vunpack.c.l.b16 %v473
        %v506 = vunpack.c.h.b16 %v473
        %v507 = vunpack.c.l.b16 %v474
        %v508 = vunpack.c.h.b16 %v474
        %v509 = vunpack.c.l.b16 %v475
        %v510 = vunpack.c.h.b16 %v475
        %v511 = vunpack.c.l.b16 %v476
        %v512 = vunpack.c.h.b16 %v476
        %v513 = vunpack.c.l.b16 %v477
        %v514 = vunpack.c.h.b16 %v477
        %v515 = vunpack.c.l.b16 %v478
        %v516 = vunpack.c.h.b16 %v478
        %v517 = vunpack.c.l.b16 %v479
        %v518 = vunpack.c.h.b16 %v479
        %v519 = vunpack.c.l.b16 %v480
        %v520 = vunpack.c.h.b16 %v480
        %v521 = vunpack.c.l.b16 %v481
        %v522 = vunpack.c.h.b16 %v481
        %v523 = vunpack.c.l.b16 %v482
        %v524 = vunpack.c.h.b16 %v482
        %v525 = vunpack.c.l.b16 %v483
        %v526 = vunpack.c.h.b16 %v483
        %v527 = vunpack.c.l.b16 %v484
        %v528 = vunpack.c.h.b16 %v484
        %v529 = vunpack.c.l.b16 %v485
        %v530 = vunpack.c.h.b16 %v485
        %v531 = vunpack.c.l.b16 %v486
        %v532 = vunpack.c.h.b16 %v486
        %v533 = vunpack.c.l.b16 %v487
        %v534 = vunpack.c.h.b16 %v487
        %v535 = vunpack.c.l.b16 %v488
        %v536 = vunpack.c.h.b16 %v488
        %v537 = vpack.c.b16 %v505, %v505
        %v538 = vpack.c.b16 %v506, %v506
        %v539 = vpack.c.b16 %v507, %v507
        %v540 = vpack.c.b16 %v508, %v508
        %v541 = vpack.c.b16 %v509, %v509
        %v542 = vpack.c.b16 %v510, %v510
        %v543 = vpack.c.b16 %v511, %v511
        %v544 = vpack.c.b16 %v512, %v512
        %v545 = vpack.c.b16 %v513, %v513
        %v546 = vpack.c.b16 %v514, %v514
        %v547 = vpack.c.b16 %v515, %v515
        %v548 = vpack.c.b16 %v516, %v516
        %v549 = vpack.c.b16 %v517, %v517
        %v550 = vpack.c.b16 %v518, %v518
        %v551 = vpack.c.b16 %v519, %v519
        %v552 = vpack.c.b16 %v520, %v520
        %v553 = vpack.c.b16 %v521, %v521
        %v554 = vpack.c.b16 %v522, %v522
        %v555 = vpack.c.b16 %v523, %v523
        %v556 = vpack.c.b16 %v524, %v524
        %v557 = vpack.c.b16 %v525, %v525
        %v558 = vpack.c.b16 %v526, %v526
        %v559 = vpack.c.b16 %v527, %v527
        %v560 = vpack.c.b16 %v528, %v528
        %v561 = vpack.c.b16 %v529, %v529
        %v562 = vpack.c.b16 %v530, %v530
        %v563 = vpack.c.b16 %v531, %v531
        %v564 = vpack.c.b16 %v532, %v532
        %v565 = vpack.c.b16 %v533, %v533
        %v566 = vpack.c.b16 %v534, %v534
        %v567 = vpack.c.b16 %v535, %v535
        %v568 = vpack.c.b16 %v536, %v536
        %601 = vst [vmem:[%s137] sm:$0xf] %v537
        %602 = vst [vmem:[%s137 + $0x4] sm:$0xf] %v538
        %603 = vst [vmem:[%s137 + $0x8] sm:$0xf] %v539
        %604 = vst [vmem:[%s137 + $0xc] sm:$0xf] %v540
        %605 = vst [vmem:[%s137 + $0x10] sm:$0xf] %v541
        %606 = vst [vmem:[%s137 + $0x14] sm:$0xf] %v542
        %607 = vst [vmem:[%s137 + $0x18] sm:$0xf] %v543
        %608 = vst [vmem:[%s137 + $0x1c] sm:$0xf] %v544
        %609 = vst [vmem:[%s137 + $0x20] sm:$0xf] %v545
        %610 = vst [vmem:[%s137 + $0x24] sm:$0xf] %v546
        %611 = vst [vmem:[%s137 + $0x28] sm:$0xf] %v547
        %612 = vst [vmem:[%s137 + $0x2c] sm:$0xf] %v548
        %613 = vst [vmem:[%s137 + $0x30] sm:$0xf] %v549
        %614 = vst [vmem:[%s137 + $0x34] sm:$0xf] %v550
        %615 = vst [vmem:[%s137 + $0x38] sm:$0xf] %v551
        %616 = vst [vmem:[%s137 + $0x3c] sm:$0xf] %v552
        %617 = vst [vmem:[%s137 + $0x40] sm:$0xf] %v553
        %618 = vst [vmem:[%s137 + $0x44] sm:$0xf] %v554
        %619 = vst [vmem:[%s137 + $0x48] sm:$0xf] %v555
        %620 = vst [vmem:[%s137 + $0x4c] sm:$0xf] %v556
        %621 = vst [vmem:[%s137 + $0x50] sm:$0xf] %v557
        %622 = vst [vmem:[%s137 + $0x54] sm:$0xf] %v558
        %623 = vst [vmem:[%s137 + $0x58] sm:$0xf] %v559
        %624 = vst [vmem:[%s137 + $0x5c] sm:$0xf] %v560
        %625 = vst [vmem:[%s137 + $0x60] sm:$0xf] %v561
        %626 = vst [vmem:[%s137 + $0x64] sm:$0xf] %v562
        %627 = vst [vmem:[%s137 + $0x68] sm:$0xf] %v563
        %628 = vst [vmem:[%s137 + $0x6c] sm:$0xf] %v564
        %629 = vst [vmem:[%s137 + $0x70] sm:$0xf] %v565
        %630 = vst [vmem:[%s137 + $0x74] sm:$0xf] %v566
        %631 = vst [vmem:[%s137 + $0x78] sm:$0xf] %v567
        %632 = vst [vmem:[%s137 + $0x7c] sm:$0xf] %v568
        %s633 = sand.u32 %s71, 1
        %s634 = scalar_lea.sflag [#allocation3], %s633
        %s635 = sand.u32 %s71, 1
        %s636 = smul.addr %s635, 128
        %s637 = scalar_lea.vmem [#allocation2], %s636
        // Predicated region
        $region29: #{tpu_custom_call.1} parent=27 // pred_check
          %p638 = pneg %p81
        $region30: #{tpu_custom_call.1} parent=27 // pred_check_branch
          %640 = sbr.rel (%p638) target = $region32
        $region31: #{tpu_custom_call.1} parent=27 // pred_region
          %s641 = smul.u32 32, %s16
          %s643 = ssub.s32 2048, 2048
          %644 = vsyncadd %s634, %s643
          %s645 = smul.addr %s641, 64
          %s646 = scalar_lea.hbm %s2, %s645
          %s647 = sshll.u32 %s637, 4
          %s648 = int_to_ptr.vmem [resolvable:$true] %s647
          %653 = dma.vmem_to_hbm [thread:$0]  %s648, 2048, %s646, %s634, 64, 64, 4
        $region32: #{tpu_custom_call.1} parent=27 // pred_fallthru
          _
      $region28: #{tpu_custom_call.1} parent=5 // pred_fallthru
        _
      %p654 = scmp.le.s32.totalorder 2, %s11
      // Predicated region
      $region33: #{tpu_custom_call.1} parent=5 // pred_check
        %p655 = pneg %p654
      $region34: #{tpu_custom_call.1} parent=5 // pred_check_branch
        %657 = sbr.rel (%p655) target = $region36
      $region35: #{tpu_custom_call.1} parent=5 // pred_region
        %s658 = ssub.s32 %s11, 2
        // Predicated region
        $region37: #{tpu_custom_call.1} parent=35 // pred_check
          %p659 = pneg %p87
        $region38: #{tpu_custom_call.1} parent=35 // pred_check_branch
          %661 = sbr.rel (%p659) target = $region40
        $region39: #{tpu_custom_call.1} parent=35 // pred_region
          %s662 = sand.u32 %s72, 1
          %s663 = scalar_lea.sflag [#allocation3], %s662
          %s664 = sand.u32 %s72, 1
          %s665 = smul.addr %s664, 128
          %s666 = scalar_lea.vmem [#allocation2], %s665
          %667 = dma.done %s663, 2048
        $region40: #{tpu_custom_call.1} parent=35 // pred_fallthru
          _
      $region36: #{tpu_custom_call.1} parent=5 // pred_fallthru
        _
    $region6: #{tpu_custom_call.1} parent=1 // loop_footer
      %s15 = sadd.s32 1, %s11
    $region7: #{tpu_custom_call.1} parent=1 // loop_footer_branch
      %10 = sbr.rel target = $region3
    $region8: #{tpu_custom_call.1} parent=1 // loop_exit
      _
    %668 = vsyncpa [#allocation3], 1
    %s669 = scalar_lea.sflag [#allocation3], 1
    %670 = vsyncpa %s669, 1

</llo_original>
